<compile_context>
chip_gen: v5e
topology: v5e:2x2
jax: 0.10.0
libtpu: 0.0.40
codegen_flags: <defaults>
</compile_context>

<pallas_src>
import jax
import jax.numpy as jnp
from jax.experimental import pallas as pl
from jax.experimental.pallas import tpu as pltpu


def _round_up(x, n):
    return (x + n - 1) // n * n


def _num_tensorcores():
    """Best-effort TensorCore count (2 on v7x megacore, 1 on v5e/v6e)."""
    try:
        info = pltpu.get_tpu_info()
    except Exception:
        return 1
    for attr in ("num_cores", "num_tensorcores", "tensorcores_per_chip",
                 "cores_per_chip"):
        v = getattr(info, attr, None)
        if isinstance(v, int) and v > 0:
            return v
    return 1


def _vmem_capacity_bytes():
    """Physical VMEM per TensorCore; conservative 64 MiB fallback (v7x)."""
    try:
        return int(pltpu.get_tpu_info().vmem_capacity_bytes)
    except Exception:
        return 64 * 2**20


def _pick_tile_m(m, requested, n_cores):
    """Row-tile size with minimal padding and megacore-aware grid balancing."""
    m8 = _round_up(m, 8)
    if m8 <= requested:
        if n_cores >= 2 and m8 >= 2 * 128:
            ntiles = n_cores          # split across the two v7x TensorCores
        else:
            return m8                 # single tile: no extra grid steps on 1-TC chips
    else:
        ntiles = pl.cdiv(m, requested)
        if n_cores >= 2 and ntiles % n_cores != 0:
            ntiles += n_cores - (ntiles % n_cores)   # equal work per TensorCore
    return _round_up(pl.cdiv(m, ntiles), 8)


def _head_kernel(x_ref, w1_ref, b1_ref, w2_ref, b2_ref, w3_ref, b3_ref,
                 w4_ref, b4_ref, o_ref):
    # Residual MLP hot path, fully resident in VMEM.  Activations / epilogue in
    # f32; matmuls run in the weights' native dtype (bf16 fast path) with f32
    # MXU accumulation.  If the weights were kept in f32, force true-f32 passes.
    h = x_ref[...].astype(jnp.float32)

    def dot(h_f32, w_ref):
        prec = (jax.lax.Precision.HIGHEST
                if w_ref.dtype == jnp.float32 else None)
        return jnp.dot(h_f32.astype(w_ref.dtype), w_ref[...],
                       preferred_element_type=jnp.float32, precision=prec)

    def res_block(h_f32, w_ref, b_ref):
        y = dot(h_f32, w_ref) + b_ref[...].astype(jnp.float32)
        return jnp.maximum(y, 0.0) + h_f32          # relu(Linear(h)) + h

    h = res_block(h, w1_ref, b1_ref)
    h = res_block(h, w2_ref, b2_ref)
    h = res_block(h, w3_ref, b3_ref)

    out = dot(h, w4_ref) + b4_ref[...].astype(jnp.float32)
    o_ref[...] = out.astype(o_ref.dtype)


def flatten_mlp_head(x, params, *, tile_m=256, use_bf16_weights=True):
    """x: (batch, n_vars, d_model, patch_num) -> (batch, n_vars, target_window)."""
    b, n_vars, d_model, patch_num = x.shape
    nf = d_model * patch_num
    w1, b1, w2, b2, w3, b3, w4, b4 = params
    assert w1.shape == (nf, nf) and w4.shape[0] == nf
    tw = w4.shape[1]
    out_dtype = x.dtype

    # ---- wrapper-side layout plumbing ---------------------------------------
    # Flatten(start_dim=-2) + collapse leading dims -> 2-D (M, nf) slab.
    x2d = x.reshape(b * n_vars, nf)
    m = x2d.shape[0]

    # Pad nf / target_window to lane multiples: full-width MXU passes and
    # lane-dense (unmasked) loads/stores.  The residual chain is exactly stable
    # under zero padding (padded columns stay 0 through bias=0, ReLU, +h).
    nf_pad = _round_up(nf, 128)
    tw_pad = _round_up(tw, 128)
    if nf_pad != nf:
        dn = nf_pad - nf
        x2d = jnp.pad(x2d, ((0, 0), (0, dn)))
        w1, w2, w3 = (jnp.pad(w, ((0, dn), (0, dn))) for w in (w1, w2, w3))
        b1, b2, b3 = (jnp.pad(bb, ((0, 0), (0, dn))) for bb in (b1, b2, b3))
        w4 = jnp.pad(w4, ((0, dn), (0, 0)))
    if tw_pad != tw:
        w4 = jnp.pad(w4, ((0, 0), (0, tw_pad - tw)))
        b4 = jnp.pad(b4, ((0, 0), (0, tw_pad - tw)))

    # bf16 weights: native MXU rate on v5e/v6e/v7x + half the resident VMEM.
    if use_bf16_weights and w1.dtype == jnp.float32:
        w1, w2, w3, w4 = (w.astype(jnp.bfloat16) for w in (w1, w2, w3, w4))

    # Row tiling (minimal padding; megacore-aware; no assert on M).
    n_cores = _num_tensorcores()
    tile = _pick_tile_m(m, tile_m, n_cores)
    m_pad = _round_up(m, tile)
    if m_pad != m:
        x2d = jnp.pad(x2d, ((0, m_pad - m), (0, 0)))
    grid = (m_pad // tile,)

    # ---- compiler hints ------------------------------------------------------
    weights = (w1, b1, w2, b2, w3, b3, w4, b4)
    # Single-buffered weights -> counted ONCE; row/output blocks double-buffered.
    w_bytes = sum(int(p.size) * p.dtype.itemsize for p in weights)
    x_item = x2d.dtype.itemsize
    o_item = jnp.dtype(out_dtype).itemsize
    act_bytes = 2 * tile * (nf_pad * x_item + tw_pad * o_item)
    f32_scratch = 2 * tile * nf_pad * 4          # in-kernel f32 intermediates
    vmem_needed = w_bytes + act_bytes + f32_scratch
    cap = _vmem_capacity_bytes() - 8 * 2**20     # never exceed physical VMEM
    vmem_limit = int(min(max(int(1.5 * vmem_needed), 32 * 2**20), cap))

    cost = pl.CostEstimate(
        flops=2 * m_pad * (3 * nf_pad * nf_pad + nf_pad * tw_pad),
        transcendentals=0,
        bytes_accessed=int(m_pad * nf_pad * x_item + w_bytes
                           + m_pad * tw_pad * o_item),
    )

    # ---- pallas_call ---------------------------------------------------------
    row_spec = pl.BlockSpec((tile, nf_pad), lambda i: (i, 0))
    out_spec = pl.BlockSpec((tile, tw_pad), lambda i: (i, 0))
    # Constant weight blocks: never re-fetched -> single-buffer them.
    const = lambda shape: pl.BlockSpec(shape, lambda i: (0, 0),
                                       pipeline_mode=pl.Buffered(1))

    out2d = pl.pallas_call(
        _head_kernel,
        out_shape=jax.ShapeDtypeStruct((m_pad, tw_pad), out_dtype),
        grid_spec=pltpu.PrefetchScalarGridSpec(
            num_scalar_prefetch=0,
            grid=grid,
            in_specs=[
                row_spec,
                const(w1.shape), const(b1.shape),
                const(w2.shape), const(b2.shape),
                const(w3.shape), const(b3.shape),
                const(w4.shape), const(b4.shape),
            ],
            out_specs=out_spec,
        ),
        compiler_params=pltpu.CompilerParams(
            dimension_semantics=("parallel",),
            vmem_limit_bytes=vmem_limit),
        cost_estimate=cost,
    )(x2d, w1, b1, w2, b2, w3, b3, w4, b4)

    # drop row padding and lane padding, restore (batch, n_vars, target_window)
    return out2d[:m, :tw].reshape(b, n_vars, tw)


def init_params(key, nf, target_window, dtype=jnp.float32):
    """Deterministic synthetic init (shapes follow nn.Linear(nf, ...)).
    Weights are stored pre-transposed: (in_features, out_features)."""
    ks = jax.random.split(key, 8)
    scale = 1.0 / jnp.sqrt(nf)

    def lin(kw, kb, out_dim):
        w = jax.random.uniform(kw, (nf, out_dim), dtype, -scale, scale)
        b_ = jax.random.uniform(kb, (1, out_dim), dtype, -scale, scale)
        return w, b_

    w1, b1 = lin(ks[0], ks[1], nf)
    w2, b2 = lin(ks[2], ks[3], nf)
    w3, b3 = lin(ks[4], ks[5], nf)
    w4, b4 = lin(ks[6], ks[7], target_window)
    return (w1, b1, w2, b2, w3, b3, w4, b4)


def _reference(x, params, weight_dtype=jnp.float32):
    """Pure-JAX reference of the same forward pass.  weight_dtype=bf16 mirrors
    the kernel's fast path (bf16 matmuls, f32 accumulation, f32 epilogue)."""
    w1, b1, w2, b2, w3, b3, w4, b4 = params
    b, n_vars, d_model, patch_num = x.shape
    h = x.reshape(b, n_vars, d_model * patch_num).astype(jnp.float32)

    def lin(h_f32, w, bb):
        y = jnp.dot(h_f32.astype(weight_dtype), w.astype(weight_dtype),
                    preferred_element_type=jnp.float32)
        return y + bb.astype(jnp.float32)

    for (w, bb) in ((w1, b1), (w2, b2), (w3, b3)):
        h = jnp.maximum(lin(h, w, bb), 0.0) + h
    return lin(h, w4, b4)


if __name__ == "__main__":
    # small shapes: batch=2, n_vars=4, d_model=16, patch_num=8 -> nf=128,
    # target_window=96 (padded to 128 lanes inside the wrapper).
    batch, n_vars, d_model, patch_num = 2, 4, 16, 8
    nf = d_model * patch_num
    target_window = 96

    key = jax.random.PRNGKey(0)
    kx, kp = jax.random.split(key)
    x = jax.random.normal(kx, (batch, n_vars, d_model, patch_num), jnp.float32)
    params = init_params(kp, nf, target_window)

    out = flatten_mlp_head(x, params)
    out = jax.block_until_ready(out)
    assert out.shape == (batch, n_vars, target_window)

    # like-for-like reference (bf16 matmuls / f32 accumulation, same as kernel)
    ref_bf16 = _reference(x, params, weight_dtype=jnp.bfloat16)
    assert jnp.allclose(out, ref_bf16, atol=2e-3, rtol=2e-3), (
        float(jnp.max(jnp.abs(out - ref_bf16))))

    # sanity vs the full-f32 PyTorch-equivalent forward (bf16 MXU tolerance)
    ref_f32 = _reference(x, params, weight_dtype=jnp.float32)
    assert jnp.allclose(out, ref_f32, atol=5e-2, rtol=5e-2), (
        float(jnp.max(jnp.abs(out - ref_f32))))

    print("KERNEL_OK")
</pallas_src>

<mosaic_0001>
module attributes {stable_mosaic.version = 11 : i64} {
  func.func @_head_kernel(%arg0: i32, %arg1: memref<8x128xf32, #tpu.memory_space<vmem>>, %arg2: memref<128x128xbf16, #tpu.memory_space<vmem>>, %arg3: memref<1x128xf32, #tpu.memory_space<vmem>>, %arg4: memref<128x128xbf16, #tpu.memory_space<vmem>>, %arg5: memref<1x128xf32, #tpu.memory_space<vmem>>, %arg6: memref<128x128xbf16, #tpu.memory_space<vmem>>, %arg7: memref<1x128xf32, #tpu.memory_space<vmem>>, %arg8: memref<128x128xbf16, #tpu.memory_space<vmem>>, %arg9: memref<1x128xf32, #tpu.memory_space<vmem>>, %arg10: memref<8x128xf32, #tpu.memory_space<vmem>>) attributes {dimension_semantics = [#tpu.dimension_semantics<parallel>], iteration_bounds = array<i64: 1>, scalar_prefetch = 0 : i64, scratch_operands = 0 : i64, tpu.core_type = #tpu.core_type<tc>, window_params = [{transform_indices = @transform_0, window_bounds = array<i64: 8, 128>}, {pipeline_mode = #tpu.pipeline_mode<synchronous>, transform_indices = @transform_1, window_bounds = array<i64: 128, 128>}, {pipeline_mode = #tpu.pipeline_mode<synchronous>, transform_indices = @transform_2, window_bounds = array<i64: 1, 128>}, {pipeline_mode = #tpu.pipeline_mode<synchronous>, transform_indices = @transform_3, window_bounds = array<i64: 128, 128>}, {pipeline_mode = #tpu.pipeline_mode<synchronous>, transform_indices = @transform_4, window_bounds = array<i64: 1, 128>}, {pipeline_mode = #tpu.pipeline_mode<synchronous>, transform_indices = @transform_5, window_bounds = array<i64: 128, 128>}, {pipeline_mode = #tpu.pipeline_mode<synchronous>, transform_indices = @transform_6, window_bounds = array<i64: 1, 128>}, {pipeline_mode = #tpu.pipeline_mode<synchronous>, transform_indices = @transform_7, window_bounds = array<i64: 128, 128>}, {pipeline_mode = #tpu.pipeline_mode<synchronous>, transform_indices = @transform_8, window_bounds = array<i64: 1, 128>}, {transform_indices = @transform_9, window_bounds = array<i64: 8, 128>}]} {
    %c0 = arith.constant 0 : index
    %c0_0 = arith.constant 0 : index
    %0 = vector.load %arg1[%c0, %c0_0] : memref<8x128xf32, #tpu.memory_space<vmem>>, vector<8x128xf32>
    %1 = arith.truncf %0 : vector<8x128xf32> to vector<8x128xbf16>
    %c0_1 = arith.constant 0 : index
    %c0_2 = arith.constant 0 : index
    %2 = vector.load %arg2[%c0_1, %c0_2] : memref<128x128xbf16, #tpu.memory_space<vmem>>, vector<128x128xbf16>
    %cst = arith.constant dense<0.000000e+00> : vector<8x128xf32>
    %3 = tpu.matmul %1, %2, %cst {dimension_numbers = #tpu.dot_dimension_numbers<[1], [0], [0], [1], [0, 0, 1, 1], [], []>} : vector<8x128xbf16>, vector<128x128xbf16>, vector<8x128xf32> -> vector<8x128xf32>
    %c0_3 = arith.constant 0 : index
    %c0_4 = arith.constant 0 : index
    %4 = vector.load %arg3[%c0_3, %c0_4] : memref<1x128xf32, #tpu.memory_space<vmem>>, vector<1x128xf32>
    %5 = vector.broadcast %4 : vector<1x128xf32> to vector<8x128xf32>
    %6 = arith.addf %3, %5 : vector<8x128xf32>
    %cst_5 = arith.constant 0.000000e+00 : f32
    %7 = vector.broadcast %cst_5 : f32 to vector<8x128xf32>
    %8 = arith.maximumf %6, %7 : vector<8x128xf32>
    %9 = arith.addf %8, %0 : vector<8x128xf32>
    %10 = arith.truncf %9 : vector<8x128xf32> to vector<8x128xbf16>
    %c0_6 = arith.constant 0 : index
    %c0_7 = arith.constant 0 : index
    %11 = vector.load %arg4[%c0_6, %c0_7] : memref<128x128xbf16, #tpu.memory_space<vmem>>, vector<128x128xbf16>
    %cst_8 = arith.constant dense<0.000000e+00> : vector<8x128xf32>
    %12 = tpu.matmul %10, %11, %cst_8 {dimension_numbers = #tpu.dot_dimension_numbers<[1], [0], [0], [1], [0, 0, 1, 1], [], []>} : vector<8x128xbf16>, vector<128x128xbf16>, vector<8x128xf32> -> vector<8x128xf32>
    %c0_9 = arith.constant 0 : index
    %c0_10 = arith.constant 0 : index
    %13 = vector.load %arg5[%c0_9, %c0_10] : memref<1x128xf32, #tpu.memory_space<vmem>>, vector<1x128xf32>
    %14 = vector.broadcast %13 : vector<1x128xf32> to vector<8x128xf32>
    %15 = arith.addf %12, %14 : vector<8x128xf32>
    %cst_11 = arith.constant 0.000000e+00 : f32
    %16 = vector.broadcast %cst_11 : f32 to vector<8x128xf32>
    %17 = arith.maximumf %15, %16 : vector<8x128xf32>
    %18 = arith.addf %17, %9 : vector<8x128xf32>
    %19 = arith.truncf %18 : vector<8x128xf32> to vector<8x128xbf16>
    %c0_12 = arith.constant 0 : index
    %c0_13 = arith.constant 0 : index
    %20 = vector.load %arg6[%c0_12, %c0_13] : memref<128x128xbf16, #tpu.memory_space<vmem>>, vector<128x128xbf16>
    %cst_14 = arith.constant dense<0.000000e+00> : vector<8x128xf32>
    %21 = tpu.matmul %19, %20, %cst_14 {dimension_numbers = #tpu.dot_dimension_numbers<[1], [0], [0], [1], [0, 0, 1, 1], [], []>} : vector<8x128xbf16>, vector<128x128xbf16>, vector<8x128xf32> -> vector<8x128xf32>
    %c0_15 = arith.constant 0 : index
    %c0_16 = arith.constant 0 : index
    %22 = vector.load %arg7[%c0_15, %c0_16] : memref<1x128xf32, #tpu.memory_space<vmem>>, vector<1x128xf32>
    %23 = vector.broadcast %22 : vector<1x128xf32> to vector<8x128xf32>
    %24 = arith.addf %21, %23 : vector<8x128xf32>
    %cst_17 = arith.constant 0.000000e+00 : f32
    %25 = vector.broadcast %cst_17 : f32 to vector<8x128xf32>
    %26 = arith.maximumf %24, %25 : vector<8x128xf32>
    %27 = arith.addf %26, %18 : vector<8x128xf32>
    %28 = arith.truncf %27 : vector<8x128xf32> to vector<8x128xbf16>
    %c0_18 = arith.constant 0 : index
    %c0_19 = arith.constant 0 : index
    %29 = vector.load %arg8[%c0_18, %c0_19] : memref<128x128xbf16, #tpu.memory_space<vmem>>, vector<128x128xbf16>
    %cst_20 = arith.constant dense<0.000000e+00> : vector<8x128xf32>
    %30 = tpu.matmul %28, %29, %cst_20 {dimension_numbers = #tpu.dot_dimension_numbers<[1], [0], [0], [1], [0, 0, 1, 1], [], []>} : vector<8x128xbf16>, vector<128x128xbf16>, vector<8x128xf32> -> vector<8x128xf32>
    %c0_21 = arith.constant 0 : index
    %c0_22 = arith.constant 0 : index
    %31 = vector.load %arg9[%c0_21, %c0_22] : memref<1x128xf32, #tpu.memory_space<vmem>>, vector<1x128xf32>
    %32 = vector.broadcast %31 : vector<1x128xf32> to vector<8x128xf32>
    %33 = arith.addf %30, %32 : vector<8x128xf32>
    %c0_23 = arith.constant 0 : index
    %c0_24 = arith.constant 0 : index
    %34 = vector.load %arg10[%c0_23, %c0_24] : memref<8x128xf32, #tpu.memory_space<vmem>>, vector<8x128xf32>
    tpu.vector_store %arg10[%c0_23, %c0_24], %33 {strides = array<i32>} : memref<8x128xf32, #tpu.memory_space<vmem>>, vector<8x128xf32>,
    return
  }
  func.func @transform_0(%arg0: i32) -> (i32, i32) {
    %c0_i32 = arith.constant 0 : i32
    %c0_i32_0 = arith.constant 0 : i32
    return %arg0, %c0_i32 : i32, i32
  }
  func.func @transform_1(%arg0: i32) -> (i32, i32) {
    %c0_i32 = arith.constant 0 : i32
    %c0_i32_0 = arith.constant 0 : i32
    %c0_i32_1 = arith.constant 0 : i32
    return %c0_i32, %c0_i32_0 : i32, i32
  }
  func.func @transform_2(%arg0: i32) -> (i32, i32) {
    %c0_i32 = arith.constant 0 : i32
    %c0_i32_0 = arith.constant 0 : i32
    %c0_i32_1 = arith.constant 0 : i32
    return %c0_i32, %c0_i32_0 : i32, i32
  }
  func.func @transform_3(%arg0: i32) -> (i32, i32) {
    %c0_i32 = arith.constant 0 : i32
    %c0_i32_0 = arith.constant 0 : i32
    %c0_i32_1 = arith.constant 0 : i32
    return %c0_i32, %c0_i32_0 : i32, i32
  }
  func.func @transform_4(%arg0: i32) -> (i32, i32) {
    %c0_i32 = arith.constant 0 : i32
    %c0_i32_0 = arith.constant 0 : i32
    %c0_i32_1 = arith.constant 0 : i32
    return %c0_i32, %c0_i32_0 : i32, i32
  }
  func.func @transform_5(%arg0: i32) -> (i32, i32) {
    %c0_i32 = arith.constant 0 : i32
    %c0_i32_0 = arith.constant 0 : i32
    %c0_i32_1 = arith.constant 0 : i32
    return %c0_i32, %c0_i32_0 : i32, i32
  }
  func.func @transform_6(%arg0: i32) -> (i32, i32) {
    %c0_i32 = arith.constant 0 : i32
    %c0_i32_0 = arith.constant 0 : i32
    %c0_i32_1 = arith.constant 0 : i32
    return %c0_i32, %c0_i32_0 : i32, i32
  }
  func.func @transform_7(%arg0: i32) -> (i32, i32) {
    %c0_i32 = arith.constant 0 : i32
    %c0_i32_0 = arith.constant 0 : i32
    %c0_i32_1 = arith.constant 0 : i32
    return %c0_i32, %c0_i32_0 : i32, i32
  }
  func.func @transform_8(%arg0: i32) -> (i32, i32) {
    %c0_i32 = arith.constant 0 : i32
    %c0_i32_0 = arith.constant 0 : i32
    %c0_i32_1 = arith.constant 0 : i32
    return %c0_i32, %c0_i32_0 : i32, i32
  }
  func.func @transform_9(%arg0: i32) -> (i32, i32) {
    %c0_i32 = arith.constant 0 : i32
    %c0_i32_0 = arith.constant 0 : i32
    return %arg0, %c0_i32 : i32, i32
  }
}

</mosaic_0001>

<llo_original>
// kernel: tpu_custom_call.1
$region0: #{tpu_custom_call.1}
  #allocation0 [shape = 'u32[]', space=smem, size = 0x4, offset = 0x4, fixed_abs, tag = 'smem constant byte address 0x4 - core index']
  #allocation1 [shape = 'u32[72,128]{1,0:T(1,128)}', space=vmem, size = 0x9000, scoped, tag = 'internal scratch']
  %s0 = inlined_call_operand.hbm [shape: f32[8,128], index: 0, kind: input, shape index: {}]
  %s1 = inlined_call_operand.hbm [shape: bf16[128,128], index: 1, kind: input, shape index: {}]
  %s2 = inlined_call_operand.vmem [shape: f32[1,128], index: 2, kind: input, shape index: {}]
  %s3 = inlined_call_operand.hbm [shape: bf16[128,128], index: 3, kind: input, shape index: {}]
  %s4 = inlined_call_operand.vmem [shape: f32[1,128], index: 4, kind: input, shape index: {}]
  %s5 = inlined_call_operand.hbm [shape: bf16[128,128], index: 5, kind: input, shape index: {}]
  %s6 = inlined_call_operand.vmem [shape: f32[1,128], index: 6, kind: input, shape index: {}]
  %s7 = inlined_call_operand.hbm [shape: bf16[128,128], index: 7, kind: input, shape index: {}]
  %s8 = inlined_call_operand.vmem [shape: f32[1,128], index: 8, kind: input, shape index: {}]
  %s9 = inlined_call_operand.hbm [shape: f32[8,128], index: 9, kind: output, shape index: {}]
  %s10 = sld [smem:[#allocation0]]
  $region66: #{tpu_custom_call.1} parent=0
    _
  %s12 = ssub.s32 1, %s10
  %s13 = scalar_select 0, %s12, %s10
  $region1: #{tpu_custom_call.1} parent=0
    #allocation2 [shape = 'u8[4096]{0}', space=vmem, size = 0x1000, scoped, tag = 'input window, operand 0, single buffered']
    #allocation3 [shape = 's32[1]{0}', space=sflag, size = 0x4, scoped, tag = 'scoped memory for tpu_custom_call.1']
    #allocation4 [shape = 's32[1]{0}', space=sflag, size = 0x4, scoped, tag = 'scoped memory for tpu_custom_call.1']
    #allocation5 [shape = 'u8[32768]{0}', space=vmem, size = 0x8000, scoped, tag = 'input window, operand 1, single buffered']
    #allocation6 [shape = 's32[1]{0}', space=sflag, size = 0x4, scoped, tag = 'scoped memory for tpu_custom_call.1']
    #allocation7 [shape = 'u8[32768]{0}', space=vmem, size = 0x8000, scoped, tag = 'input window, operand 3, single buffered']
    #allocation8 [shape = 'u8[32768]{0}', space=vmem, size = 0x8000, scoped, tag = 'input window, operand 5, single buffered']
    #allocation9 [shape = 's32[1]{0}', space=sflag, size = 0x4, scoped, tag = 'scoped memory for tpu_custom_call.1']
    #allocation10 [shape = 'u8[32768]{0}', space=vmem, size = 0x8000, scoped, tag = 'input window, operand 7, single buffered']
    #allocation11 [shape = 'u8[4096]{0}', space=vmem, size = 0x1000, scoped, tag = 'output window, operand 0, single buffered']
    %14 = vsyncpa [#allocation3], 0
    %15 = vsyncpa [#allocation6], 0
    %16 = vsyncpa [#allocation9], 0
    %17 = vsyncpa [#allocation4], 0
    // Predicated region
    $region2: #{tpu_custom_call.1} parent=1 // pred_check
      _
    $region3: #{tpu_custom_call.1} parent=1 // pred_check_branch
      %19 = sbr.rel (0) target = $region5
    $region4: #{tpu_custom_call.1} parent=1 // pred_region
      %21 = vsyncadd [#allocation3], 0
      %s23 = sshll.u32 %s0, 4
      %s24 = int_to_ptr.hbm [resolvable:$true] %s23
      %s25 = sshll.u32 [#allocation2], 4
      %s26 = int_to_ptr.vmem [resolvable:$true] %s25
      %28 = dma.hbm_to_vmem [thread:$0]  %s24, 128, %s26, [#allocation3]
    $region5: #{tpu_custom_call.1} parent=1 // pred_fallthru
      _
    // Predicated region
    $region6: #{tpu_custom_call.1} parent=1 // pred_check
      _
    $region7: #{tpu_custom_call.1} parent=1 // pred_check_branch
      %30 = sbr.rel (0) target = $region9
    $region8: #{tpu_custom_call.1} parent=1 // pred_region
      %32 = vsyncadd [#allocation6], 0
      %s33 = sshll.u32 %s1, 4
      %s34 = int_to_ptr.hbm [resolvable:$true] %s33
      %s35 = sshll.u32 [#allocation5], 4
      %s36 = int_to_ptr.vmem [resolvable:$true] %s35
      %41 = dma.hbm_to_vmem [thread:$0]  %s34, 1024, %s36, [#allocation6], 64, 64, 4
    $region9: #{tpu_custom_call.1} parent=1 // pred_fallthru
      _
    // Predicated region
    $region10: #{tpu_custom_call.1} parent=1 // pred_check
      _
    $region11: #{tpu_custom_call.1} parent=1 // pred_check_branch
      %43 = sbr.rel (0) target = $region13
    $region12: #{tpu_custom_call.1} parent=1 // pred_region
      _
    $region13: #{tpu_custom_call.1} parent=1 // pred_fallthru
      _
    // Predicated region
    $region14: #{tpu_custom_call.1} parent=1 // pred_check
      _
    $region15: #{tpu_custom_call.1} parent=1 // pred_check_branch
      %45 = sbr.rel (0) target = $region17
    $region16: #{tpu_custom_call.1} parent=1 // pred_region
      %47 = vsyncadd [#allocation6], 0
      %s48 = sshll.u32 %s3, 4
      %s49 = int_to_ptr.hbm [resolvable:$true] %s48
      %s50 = sshll.u32 [#allocation7], 4
      %s51 = int_to_ptr.vmem [resolvable:$true] %s50
      %56 = dma.hbm_to_vmem [thread:$0]  %s49, 1024, %s51, [#allocation6], 64, 64, 4
    $region17: #{tpu_custom_call.1} parent=1 // pred_fallthru
      _
    // Predicated region
    $region18: #{tpu_custom_call.1} parent=1 // pred_check
      _
    $region19: #{tpu_custom_call.1} parent=1 // pred_check_branch
      %58 = sbr.rel (0) target = $region21
    $region20: #{tpu_custom_call.1} parent=1 // pred_region
      _
    $region21: #{tpu_custom_call.1} parent=1 // pred_fallthru
      _
    // Predicated region
    $region22: #{tpu_custom_call.1} parent=1 // pred_check
      _
    $region23: #{tpu_custom_call.1} parent=1 // pred_check_branch
      %60 = sbr.rel (0) target = $region25
    $region24: #{tpu_custom_call.1} parent=1 // pred_region
      %62 = vsyncadd [#allocation9], 0
      %s63 = sshll.u32 %s5, 4
      %s64 = int_to_ptr.hbm [resolvable:$true] %s63
      %s65 = sshll.u32 [#allocation8], 4
      %s66 = int_to_ptr.vmem [resolvable:$true] %s65
      %71 = dma.hbm_to_vmem [thread:$0]  %s64, 1024, %s66, [#allocation9], 64, 64, 4
    $region25: #{tpu_custom_call.1} parent=1 // pred_fallthru
      _
    // Predicated region
    $region26: #{tpu_custom_call.1} parent=1 // pred_check
      _
    $region27: #{tpu_custom_call.1} parent=1 // pred_check_branch
      %73 = sbr.rel (0) target = $region29
    $region28: #{tpu_custom_call.1} parent=1 // pred_region
      _
    $region29: #{tpu_custom_call.1} parent=1 // pred_fallthru
      _
    // Predicated region
    $region30: #{tpu_custom_call.1} parent=1 // pred_check
      _
    $region31: #{tpu_custom_call.1} parent=1 // pred_check_branch
      %75 = sbr.rel (0) target = $region33
    $region32: #{tpu_custom_call.1} parent=1 // pred_region
      %77 = vsyncadd [#allocation9], 0
      %s78 = sshll.u32 %s7, 4
      %s79 = int_to_ptr.hbm [resolvable:$true] %s78
      %s80 = sshll.u32 [#allocation10], 4
      %s81 = int_to_ptr.vmem [resolvable:$true] %s80
      %86 = dma.hbm_to_vmem [thread:$0]  %s79, 1024, %s81, [#allocation9], 64, 64, 4
    $region33: #{tpu_custom_call.1} parent=1 // pred_fallthru
      _
    // Predicated region
    $region34: #{tpu_custom_call.1} parent=1 // pred_check
      _
    $region35: #{tpu_custom_call.1} parent=1 // pred_check_branch
      %88 = sbr.rel (0) target = $region37
    $region36: #{tpu_custom_call.1} parent=1 // pred_region
      _
    $region37: #{tpu_custom_call.1} parent=1 // pred_fallthru
      _
    // Predicated region
    $region38: #{tpu_custom_call.1} parent=1 // pred_check
      _
    $region39: #{tpu_custom_call.1} parent=1 // pred_check_branch
      %90 = sbr.rel (0) target = $region41
    $region40: #{tpu_custom_call.1} parent=1 // pred_region
      %92 = dma.done [#allocation3], 128
    $region41: #{tpu_custom_call.1} parent=1 // pred_fallthru
      _
    // Predicated region
    $region42: #{tpu_custom_call.1} parent=1 // pred_check
      _
    $region43: #{tpu_custom_call.1} parent=1 // pred_check_branch
      %94 = sbr.rel (0) target = $region45
    $region44: #{tpu_custom_call.1} parent=1 // pred_region
      %96 = dma.done [#allocation6], 1024
    $region45: #{tpu_custom_call.1} parent=1 // pred_fallthru
      _
    // Predicated region
    $region46: #{tpu_custom_call.1} parent=1 // pred_check
      _
    $region47: #{tpu_custom_call.1} parent=1 // pred_check_branch
      %98 = sbr.rel (0) target = $region49
    $region48: #{tpu_custom_call.1} parent=1 // pred_region
      %100 = dma.done [#allocation6], 1024
    $region49: #{tpu_custom_call.1} parent=1 // pred_fallthru
      _
    // Predicated region
    $region50: #{tpu_custom_call.1} parent=1 // pred_check
      _
    $region51: #{tpu_custom_call.1} parent=1 // pred_check_branch
      %102 = sbr.rel (0) target = $region53
    $region52: #{tpu_custom_call.1} parent=1 // pred_region
      %104 = dma.done [#allocation9], 1024
    $region53: #{tpu_custom_call.1} parent=1 // pred_fallthru
      _
    // Predicated region
    $region54: #{tpu_custom_call.1} parent=1 // pred_check
      _
    $region55: #{tpu_custom_call.1} parent=1 // pred_check_branch
      %106 = sbr.rel (0) target = $region57
    $region56: #{tpu_custom_call.1} parent=1 // pred_region
      %108 = dma.done [#allocation9], 1024
    $region57: #{tpu_custom_call.1} parent=1 // pred_fallthru
      _
    %v109 = vld [vmem:[#allocation2] sm:$0xff]
    %v110 = vpack.c.bf16 %v109, %v109
    %v111 = vld [vmem:[#allocation5] sm:$0xf]
    %v112 = vld [vmem:[#allocation5 + $0x4] sm:$0xf]
    %v113 = vld [vmem:[#allocation5 + $0x8] sm:$0xf]
    %v114 = vld [vmem:[#allocation5 + $0xc] sm:$0xf]
    %v115 = vld [vmem:[#allocation5 + $0x10] sm:$0xf]
    %v116 = vld [vmem:[#allocation5 + $0x14] sm:$0xf]
    %v117 = vld [vmem:[#allocation5 + $0x18] sm:$0xf]
    %v118 = vld [vmem:[#allocation5 + $0x1c] sm:$0xf]
    %v119 = vld [vmem:[#allocation5 + $0x20] sm:$0xf]
    %v120 = vld [vmem:[#allocation5 + $0x24] sm:$0xf]
    %v121 = vld [vmem:[#allocation5 + $0x28] sm:$0xf]
    %v122 = vld [vmem:[#allocation5 + $0x2c] sm:$0xf]
    %v123 = vld [vmem:[#allocation5 + $0x30] sm:$0xf]
    %v124 = vld [vmem:[#allocation5 + $0x34] sm:$0xf]
    %v125 = vld [vmem:[#allocation5 + $0x38] sm:$0xf]
    %v126 = vld [vmem:[#allocation5 + $0x3c] sm:$0xf]
    %v127 = vld [vmem:[%s2] sm:$0x1]
    %v129 = vperm.slane %v127, 0
    %v147 = vunpack.c.l.b16 %v111
    %v148 = vunpack.c.l.b16 %v112
    %v149 = vunpack.c.l.b16 %v113
    %v150 = vunpack.c.l.b16 %v114
    %v151 = vunpack.c.l.b16 %v115
    %v152 = vunpack.c.l.b16 %v116
    %v153 = vunpack.c.l.b16 %v117
    %v154 = vunpack.c.l.b16 %v118
    %v155 = vunpack.c.l.b16 %v119
    %v156 = vunpack.c.l.b16 %v120
    %v157 = vunpack.c.l.b16 %v121
    %v158 = vunpack.c.l.b16 %v122
    %v159 = vunpack.c.l.b16 %v123
    %v160 = vunpack.c.l.b16 %v124
    %v161 = vunpack.c.l.b16 %v125
    %v162 = vunpack.c.l.b16 %v126
    %v163 = vpack.c.b16 %v148, %v147
    %v164 = vpack.c.b16 %v150, %v149
    %v165 = vpack.c.b16 %v152, %v151
    %v166 = vpack.c.b16 %v154, %v153
    %v167 = vpack.c.b16 %v156, %v155
    %v168 = vpack.c.b16 %v158, %v157
    %v169 = vpack.c.b16 %v160, %v159
    %v170 = vpack.c.b16 %v162, %v161
    %179 = vmatpush.bf16.msra.mxu0 %v170
    %180 = vmatpush.bf16.msra.mxu0 %v169
    %181 = vmatpush.bf16.msra.mxu0 %v168
    %182 = vmatpush.bf16.msra.mxu0 %v167
    %183 = vmatpush.bf16.msra.mxu0 %v166
    %184 = vmatpush.bf16.msra.mxu0 %v165
    %185 = vmatpush.bf16.msra.mxu0 %v164
    %186 = vmatpush.bf16.msra.mxu0 %v163
    %187 = vmatmul.bf16.gmra.mxu0 %v110
    %v188 = vpop.f32.mrf.mxu0
    %v189 = vadd.f32 %v129, %v188
    %v190 = vpop.f32.mrf.mxu0
    %191 = vdwg.mxu0
    %v192 = vmax.f32 %v189, 0.0
    %v193 = vadd.f32 %v192, %v109
    %v194 = vpack.c.bf16 %v193, %v193
    %v195 = vld [vmem:[#allocation7] sm:$0xf]
    %v196 = vld [vmem:[#allocation7 + $0x4] sm:$0xf]
    %v197 = vld [vmem:[#allocation7 + $0x8] sm:$0xf]
    %v198 = vld [vmem:[#allocation7 + $0xc] sm:$0xf]
    %v199 = vld [vmem:[#allocation7 + $0x10] sm:$0xf]
    %v200 = vld [vmem:[#allocation7 + $0x14] sm:$0xf]
    %v201 = vld [vmem:[#allocation7 + $0x18] sm:$0xf]
    %v202 = vld [vmem:[#allocation7 + $0x1c] sm:$0xf]
    %v203 = vld [vmem:[#allocation7 + $0x20] sm:$0xf]
    %v204 = vld [vmem:[#allocation7 + $0x24] sm:$0xf]
    %v205 = vld [vmem:[#allocation7 + $0x28] sm:$0xf]
    %v206 = vld [vmem:[#allocation7 + $0x2c] sm:$0xf]
    %v207 = vld [vmem:[#allocation7 + $0x30] sm:$0xf]
    %v208 = vld [vmem:[#allocation7 + $0x34] sm:$0xf]
    %v209 = vld [vmem:[#allocation7 + $0x38] sm:$0xf]
    %v210 = vld [vmem:[#allocation7 + $0x3c] sm:$0xf]
    %v211 = vld [vmem:[%s4] sm:$0x1]
    %v213 = vperm.slane %v211, 0
    %v231 = vunpack.c.l.b16 %v195
    %v232 = vunpack.c.l.b16 %v196
    %v233 = vunpack.c.l.b16 %v197
    %v234 = vunpack.c.l.b16 %v198
    %v235 = vunpack.c.l.b16 %v199
    %v236 = vunpack.c.l.b16 %v200
    %v237 = vunpack.c.l.b16 %v201
    %v238 = vunpack.c.l.b16 %v202
    %v239 = vunpack.c.l.b16 %v203
    %v240 = vunpack.c.l.b16 %v204
    %v241 = vunpack.c.l.b16 %v205
    %v242 = vunpack.c.l.b16 %v206
    %v243 = vunpack.c.l.b16 %v207
    %v244 = vunpack.c.l.b16 %v208
    %v245 = vunpack.c.l.b16 %v209
    %v246 = vunpack.c.l.b16 %v210
    %v247 = vpack.c.b16 %v232, %v231
    %v248 = vpack.c.b16 %v234, %v233
    %v249 = vpack.c.b16 %v236, %v235
    %v250 = vpack.c.b16 %v238, %v237
    %v251 = vpack.c.b16 %v240, %v239
    %v252 = vpack.c.b16 %v242, %v241
    %v253 = vpack.c.b16 %v244, %v243
    %v254 = vpack.c.b16 %v246, %v245
    %263 = vmatpush.bf16.msra.mxu0 %v254
    %264 = vmatpush.bf16.msra.mxu0 %v253
    %265 = vmatpush.bf16.msra.mxu0 %v252
    %266 = vmatpush.bf16.msra.mxu0 %v251
    %267 = vmatpush.bf16.msra.mxu0 %v250
    %268 = vmatpush.bf16.msra.mxu0 %v249
    %269 = vmatpush.bf16.msra.mxu0 %v248
    %270 = vmatpush.bf16.msra.mxu0 %v247
    %271 = vmatmul.bf16.gmra.mxu0 %v194
    %v272 = vpop.f32.mrf.mxu0
    %v273 = vadd.f32 %v213, %v272
    %v274 = vpop.f32.mrf.mxu0
    %275 = vdwg.mxu0
    %v276 = vmax.f32 %v273, 0.0
    %v277 = vadd.f32 %v276, %v193
    %v278 = vpack.c.bf16 %v277, %v277
    %v279 = vld [vmem:[#allocation8] sm:$0xf]
    %v280 = vld [vmem:[#allocation8 + $0x4] sm:$0xf]
    %v281 = vld [vmem:[#allocation8 + $0x8] sm:$0xf]
    %v282 = vld [vmem:[#allocation8 + $0xc] sm:$0xf]
    %v283 = vld [vmem:[#allocation8 + $0x10] sm:$0xf]
    %v284 = vld [vmem:[#allocation8 + $0x14] sm:$0xf]
    %v285 = vld [vmem:[#allocation8 + $0x18] sm:$0xf]
    %v286 = vld [vmem:[#allocation8 + $0x1c] sm:$0xf]
    %v287 = vld [vmem:[#allocation8 + $0x20] sm:$0xf]
    %v288 = vld [vmem:[#allocation8 + $0x24] sm:$0xf]
    %v289 = vld [vmem:[#allocation8 + $0x28] sm:$0xf]
    %v290 = vld [vmem:[#allocation8 + $0x2c] sm:$0xf]
    %v291 = vld [vmem:[#allocation8 + $0x30] sm:$0xf]
    %v292 = vld [vmem:[#allocation8 + $0x34] sm:$0xf]
    %v293 = vld [vmem:[#allocation8 + $0x38] sm:$0xf]
    %v294 = vld [vmem:[#allocation8 + $0x3c] sm:$0xf]
    %v295 = vld [vmem:[%s6] sm:$0x1]
    %v297 = vperm.slane %v295, 0
    %v315 = vunpack.c.l.b16 %v279
    %v316 = vunpack.c.l.b16 %v280
    %v317 = vunpack.c.l.b16 %v281
    %v318 = vunpack.c.l.b16 %v282
    %v319 = vunpack.c.l.b16 %v283
    %v320 = vunpack.c.l.b16 %v284
    %v321 = vunpack.c.l.b16 %v285
    %v322 = vunpack.c.l.b16 %v286
    %v323 = vunpack.c.l.b16 %v287
    %v324 = vunpack.c.l.b16 %v288
    %v325 = vunpack.c.l.b16 %v289
    %v326 = vunpack.c.l.b16 %v290
    %v327 = vunpack.c.l.b16 %v291
    %v328 = vunpack.c.l.b16 %v292
    %v329 = vunpack.c.l.b16 %v293
    %v330 = vunpack.c.l.b16 %v294
    %v331 = vpack.c.b16 %v316, %v315
    %v332 = vpack.c.b16 %v318, %v317
    %v333 = vpack.c.b16 %v320, %v319
    %v334 = vpack.c.b16 %v322, %v321
    %v335 = vpack.c.b16 %v324, %v323
    %v336 = vpack.c.b16 %v326, %v325
    %v337 = vpack.c.b16 %v328, %v327
    %v338 = vpack.c.b16 %v330, %v329
    %347 = vmatpush.bf16.msra.mxu0 %v338
    %348 = vmatpush.bf16.msra.mxu0 %v337
    %349 = vmatpush.bf16.msra.mxu0 %v336
    %350 = vmatpush.bf16.msra.mxu0 %v335
    %351 = vmatpush.bf16.msra.mxu0 %v334
    %352 = vmatpush.bf16.msra.mxu0 %v333
    %353 = vmatpush.bf16.msra.mxu0 %v332
    %354 = vmatpush.bf16.msra.mxu0 %v331
    %355 = vmatmul.bf16.gmra.mxu0 %v278
    %v356 = vpop.f32.mrf.mxu0
    %v357 = vadd.f32 %v297, %v356
    %v358 = vpop.f32.mrf.mxu0
    %359 = vdwg.mxu0
    %v360 = vmax.f32 %v357, 0.0
    %v361 = vadd.f32 %v360, %v277
    %v362 = vpack.c.bf16 %v361, %v361
    %v363 = vld [vmem:[#allocation10] sm:$0xf]
    %v364 = vld [vmem:[#allocation10 + $0x4] sm:$0xf]
    %v365 = vld [vmem:[#allocation10 + $0x8] sm:$0xf]
    %v366 = vld [vmem:[#allocation10 + $0xc] sm:$0xf]
    %v367 = vld [vmem:[#allocation10 + $0x10] sm:$0xf]
    %v368 = vld [vmem:[#allocation10 + $0x14] sm:$0xf]
    %v369 = vld [vmem:[#allocation10 + $0x18] sm:$0xf]
    %v370 = vld [vmem:[#allocation10 + $0x1c] sm:$0xf]
    %v371 = vld [vmem:[#allocation10 + $0x20] sm:$0xf]
    %v372 = vld [vmem:[#allocation10 + $0x24] sm:$0xf]
    %v373 = vld [vmem:[#allocation10 + $0x28] sm:$0xf]
    %v374 = vld [vmem:[#allocation10 + $0x2c] sm:$0xf]
    %v375 = vld [vmem:[#allocation10 + $0x30] sm:$0xf]
    %v376 = vld [vmem:[#allocation10 + $0x34] sm:$0xf]
    %v377 = vld [vmem:[#allocation10 + $0x38] sm:$0xf]
    %v378 = vld [vmem:[#allocation10 + $0x3c] sm:$0xf]
    %v379 = vld [vmem:[%s8] sm:$0x1]
    %v381 = vperm.slane %v379, 0
    %v399 = vunpack.c.l.b16 %v363
    %v400 = vunpack.c.l.b16 %v364
    %v401 = vunpack.c.l.b16 %v365
    %v402 = vunpack.c.l.b16 %v366
    %v403 = vunpack.c.l.b16 %v367
    %v404 = vunpack.c.l.b16 %v368
    %v405 = vunpack.c.l.b16 %v369
    %v406 = vunpack.c.l.b16 %v370
    %v407 = vunpack.c.l.b16 %v371
    %v408 = vunpack.c.l.b16 %v372
    %v409 = vunpack.c.l.b16 %v373
    %v410 = vunpack.c.l.b16 %v374
    %v411 = vunpack.c.l.b16 %v375
    %v412 = vunpack.c.l.b16 %v376
    %v413 = vunpack.c.l.b16 %v377
    %v414 = vunpack.c.l.b16 %v378
    %v415 = vpack.c.b16 %v400, %v399
    %v416 = vpack.c.b16 %v402, %v401
    %v417 = vpack.c.b16 %v404, %v403
    %v418 = vpack.c.b16 %v406, %v405
    %v419 = vpack.c.b16 %v408, %v407
    %v420 = vpack.c.b16 %v410, %v409
    %v421 = vpack.c.b16 %v412, %v411
    %v422 = vpack.c.b16 %v414, %v413
    %431 = vmatpush.bf16.msra.mxu0 %v422
    %432 = vmatpush.bf16.msra.mxu0 %v421
    %433 = vmatpush.bf16.msra.mxu0 %v420
    %434 = vmatpush.bf16.msra.mxu0 %v419
    %435 = vmatpush.bf16.msra.mxu0 %v418
    %436 = vmatpush.bf16.msra.mxu0 %v417
    %437 = vmatpush.bf16.msra.mxu0 %v416
    %438 = vmatpush.bf16.msra.mxu0 %v415
    %439 = vmatmul.bf16.gmra.mxu0 %v362
    %v440 = vpop.f32.mrf.mxu0
    %v441 = vadd.f32 %v381, %v440
    %v442 = vpop.f32.mrf.mxu0
    %443 = vdwg.mxu0
    %444 = vst [vmem:[#allocation11] sm:$0xff] %v441
    // Predicated region
    $region58: #{tpu_custom_call.1} parent=1 // pred_check
      _
    $region59: #{tpu_custom_call.1} parent=1 // pred_check_branch
      %446 = sbr.rel (0) target = $region61
    $region60: #{tpu_custom_call.1} parent=1 // pred_region
      %448 = vsyncadd [#allocation4], 0
      %s450 = sshll.u32 [#allocation11], 4
      %s451 = int_to_ptr.vmem [resolvable:$true] %s450
      %s452 = sshll.u32 %s9, 4
      %s453 = int_to_ptr.hbm [resolvable:$true] %s452
      %455 = dma.vmem_to_hbm [thread:$0]  %s451, 128, %s453, [#allocation4]
    $region61: #{tpu_custom_call.1} parent=1 // pred_fallthru
      _
    // Predicated region
    $region62: #{tpu_custom_call.1} parent=1 // pred_check
      _
    $region63: #{tpu_custom_call.1} parent=1 // pred_check_branch
      %457 = sbr.rel (0) target = $region65
    $region64: #{tpu_custom_call.1} parent=1 // pred_region
      %459 = dma.done [#allocation4], 128
    $region65: #{tpu_custom_call.1} parent=1 // pred_fallthru
      _
    %460 = vsyncpa [#allocation3], 1
    %461 = vsyncpa [#allocation6], 1
    %462 = vsyncpa [#allocation9], 1
    %463 = vsyncpa [#allocation4], 1

</llo_original>
